<compile_context>
chip_gen: v6e
topology: v6e:2x2x1
jax: 0.10.0
libtpu: 0.0.40
codegen_flags: <defaults>
</compile_context>

<pallas_src>
import jax
import jax.numpy as jnp
from jax.experimental import pallas as pl
from jax.experimental.pallas import tpu as pltpu


def _head_kernel(x_ref, w1_ref, b1_ref, w2_ref, b2_ref, out_ref):
    # x tile: [TB, H] bf16 (streamed); W1/W2 resident bf16; biases f32.
    h = jnp.dot(x_ref[...], w1_ref[...],
                preferred_element_type=jnp.float32)       # [TB, H] f32 acc
    h = jnp.tanh(h + b1_ref[...])                         # f32 bias + tanh

    # out_proj into the lane-dense padded slab: [TB, Lpad].
    o = jnp.dot(h.astype(jnp.bfloat16), w2_ref[...],
                preferred_element_type=jnp.float32)
    out_ref[...] = (o + b2_ref[...]).astype(out_ref.dtype)


def _round_up(x, m):
    return (x + m - 1) // m * m


def hubert_classification_head(features, w_dense, b_dense, w_out, b_out,
                               *, block_b=2048):
    """features: [B, H]; w_dense: [H, H]; b_dense: [H] or [1, H];
       w_out: [H, L]; b_out: [L] or [1, L]  ->  logits [B, L] (features.dtype).

    Note: for genuinely tiny batches (B ~ 2) a fused XLA matmul pair is
    faster than any custom kernel; this path is intended for the
    large-batch / feature-extraction regime but stays correct for small B.
    """
    B, H = features.shape
    L = w_out.shape[1]

    # Lane-dense output width (multiple of 128).
    Lp = _round_up(max(L, 128), 128)

    # Batch tile: multiple of 16 sublanes (covers bf16 packing and f32).
    # For mid/large batches aim for >= 2 grid steps so v7x megacore can split
    # the batch axis across its two TensorCores.
    g = 16
    if B <= 2 * g:
        TB = _round_up(max(B, g), g)                      # tiny batch: 1 step
    else:
        TB = min(_round_up(block_b, g), _round_up(pl.cdiv(B, 2), g))

    # VMEM budget: x + out double-buffered per step, weights resident
    # (pipeline still double-buffers them).  Shrink TB if the estimate gets
    # too large for the tightest budget (v7x: 64 MiB physical per TC).
    def _est(tb):
        return (2 * tb * H * 2            # x double buffer (bf16)
                + 2 * tb * Lp * 4         # out double buffer (<= f32)
                + 2 * H * H * 2           # resident W1 (bf16)
                + 2 * H * Lp * 2          # resident W2 (bf16, lane-padded)
                + 4 * (H + Lp) * 4)       # biases (f32)
    while _est(TB) > (28 << 20) and TB > g:
        TB = max(g, _round_up(TB // 2, g))
    vmem_limit = min(40 << 20, max(16 << 20, _est(TB) + (4 << 20)))

    # bf16 streamed activations & weights (f32 accumulation in-kernel);
    # f32 biases.  No batch padding: Pallas masks the ragged last block.
    x = features.astype(jnp.bfloat16)                                   # [B, H]
    w1 = w_dense.astype(jnp.bfloat16)                                   # [H, H]
    b1 = jnp.reshape(b_dense, (1, H)).astype(jnp.float32)               # [1, H]
    w2 = jnp.pad(w_out, ((0, 0), (0, Lp - L))).astype(jnp.bfloat16)     # [H, Lp]
    b2 = jnp.pad(jnp.reshape(b_out, (1, L)),
                 ((0, 0), (0, Lp - L))).astype(jnp.float32)             # [1, Lp]

    out = pl.pallas_call(
        _head_kernel,
        out_shape=jax.ShapeDtypeStruct((B, Lp), features.dtype),
        grid=(pl.cdiv(B, TB),),
        in_specs=[
            pl.BlockSpec((TB, H), lambda i: (i, 0)),   # streamed bf16 x tiles
            pl.BlockSpec((H, H), lambda i: (0, 0)),    # resident W1
            pl.BlockSpec((1, H), lambda i: (0, 0)),    # resident b1
            pl.BlockSpec((H, Lp), lambda i: (0, 0)),   # resident W2 (lane-padded)
            pl.BlockSpec((1, Lp), lambda i: (0, 0)),   # resident b2
        ],
        out_specs=pl.BlockSpec((TB, Lp), lambda i: (i, 0)),
        compiler_params=pltpu.CompilerParams(
            dimension_semantics=("parallel",),         # megacore shard on v7x
            vmem_limit_bytes=vmem_limit,               # v5e default is 16 MiB
        ),
    )(x, w1, b1, w2, b2)

    # Strip the label-lane padding outside the kernel (layout plumbing only).
    return out[:, :L]


if __name__ == "__main__":
    # Small shapes consistent with the module: pooled hubert features [B, hidden].
    B = 2
    hidden_size = 32
    num_labels = 4

    key = jax.random.PRNGKey(0)
    k_x, k_w1, k_b1, k_w2, k_b2 = jax.random.split(key, 5)

    features = jax.random.normal(k_x, (B, hidden_size), dtype=jnp.float32)

    # Deterministic synthetic parameters (weights stored as [in, out]).
    w_dense = jax.random.normal(k_w1, (hidden_size, hidden_size), jnp.float32) * 0.05
    b_dense = jax.random.normal(k_b1, (1, hidden_size), jnp.float32) * 0.01
    w_out = jax.random.normal(k_w2, (hidden_size, num_labels), jnp.float32) * 0.05
    b_out = jax.random.normal(k_b2, (1, num_labels), jnp.float32) * 0.01

    # TODO(synk): dropout is treated as identity (inference mode); training-mode
    # dropout would use pltpu.prng_seed / pltpu.stateful_bernoulli inside the kernel.

    logits = hubert_classification_head(features, w_dense, b_dense, w_out, b_out)
    jax.block_until_ready(logits)

    # Pure-JAX f32 reference; tolerance covers bf16 activation/weight rounding
    # inside the kernel (f32 accumulation keeps the error small).
    ref = jnp.tanh(features @ w_dense + b_dense) @ w_out + b_out
    assert logits.shape == (B, num_labels)
    assert jnp.allclose(logits, ref, atol=1.5e-2, rtol=1.5e-2), "mismatch vs reference"

    print("KERNEL_OK")
</pallas_src>

<mosaic_0001>
module attributes {stable_mosaic.version = 11 : i64} {
  func.func @_head_kernel(%arg0: i32, %arg1: memref<16x32xbf16, #tpu.memory_space<vmem>>, %arg2: memref<32x32xbf16, #tpu.memory_space<vmem>>, %arg3: memref<1x32xf32, #tpu.memory_space<vmem>>, %arg4: memref<32x128xbf16, #tpu.memory_space<vmem>>, %arg5: memref<1x128xf32, #tpu.memory_space<vmem>>, %arg6: memref<16x128xf32, #tpu.memory_space<vmem>>) attributes {dimension_semantics = [#tpu.dimension_semantics<parallel>], iteration_bounds = array<i64: 1>, scalar_prefetch = 0 : i64, scratch_operands = 0 : i64, tpu.core_type = #tpu.core_type<tc>, window_params = [{transform_indices = @transform_0, window_bounds = array<i64: 16, 32>}, {pipeline_mode = #tpu.pipeline_mode<synchronous>, transform_indices = @transform_1, window_bounds = array<i64: 32, 32>}, {pipeline_mode = #tpu.pipeline_mode<synchronous>, transform_indices = @transform_2, window_bounds = array<i64: 1, 32>}, {pipeline_mode = #tpu.pipeline_mode<synchronous>, transform_indices = @transform_3, window_bounds = array<i64: 32, 128>}, {pipeline_mode = #tpu.pipeline_mode<synchronous>, transform_indices = @transform_4, window_bounds = array<i64: 1, 128>}, {transform_indices = @transform_5, window_bounds = array<i64: 16, 128>}]} {
    %c0 = arith.constant 0 : index
    %c0_0 = arith.constant 0 : index
    %0 = vector.load %arg1[%c0, %c0_0] : memref<16x32xbf16, #tpu.memory_space<vmem>>, vector<16x32xbf16>
    %c0_1 = arith.constant 0 : index
    %c0_2 = arith.constant 0 : index
    %1 = vector.load %arg2[%c0_1, %c0_2] : memref<32x32xbf16, #tpu.memory_space<vmem>>, vector<32x32xbf16>
    %cst = arith.constant dense<0.000000e+00> : vector<16x32xf32>
    %2 = tpu.matmul %0, %1, %cst {dimension_numbers = #tpu.dot_dimension_numbers<[1], [0], [0], [1], [0, 0, 1, 1], [], []>} : vector<16x32xbf16>, vector<32x32xbf16>, vector<16x32xf32> -> vector<16x32xf32>
    %c0_3 = arith.constant 0 : index
    %c0_4 = arith.constant 0 : index
    %3 = vector.load %arg3[%c0_3, %c0_4] : memref<1x32xf32, #tpu.memory_space<vmem>>, vector<1x32xf32>
    %4 = vector.broadcast %3 : vector<1x32xf32> to vector<16x32xf32>
    %5 = arith.addf %2, %4 : vector<16x32xf32>
    %6 = math.tanh %5 : vector<16x32xf32>
    %7 = arith.truncf %6 : vector<16x32xf32> to vector<16x32xbf16>
    %c0_5 = arith.constant 0 : index
    %c0_6 = arith.constant 0 : index
    %8 = vector.load %arg4[%c0_5, %c0_6] : memref<32x128xbf16, #tpu.memory_space<vmem>>, vector<32x128xbf16>
    %cst_7 = arith.constant dense<0.000000e+00> : vector<16x128xf32>
    %9 = tpu.matmul %7, %8, %cst_7 {dimension_numbers = #tpu.dot_dimension_numbers<[1], [0], [0], [1], [0, 0, 1, 1], [], []>} : vector<16x32xbf16>, vector<32x128xbf16>, vector<16x128xf32> -> vector<16x128xf32>
    %c0_8 = arith.constant 0 : index
    %c0_9 = arith.constant 0 : index
    %10 = vector.load %arg5[%c0_8, %c0_9] : memref<1x128xf32, #tpu.memory_space<vmem>>, vector<1x128xf32>
    %11 = vector.broadcast %10 : vector<1x128xf32> to vector<16x128xf32>
    %12 = arith.addf %9, %11 : vector<16x128xf32>
    %c0_10 = arith.constant 0 : index
    %c0_11 = arith.constant 0 : index
    %13 = vector.load %arg6[%c0_10, %c0_11] : memref<16x128xf32, #tpu.memory_space<vmem>>, vector<16x128xf32>
    tpu.vector_store %arg6[%c0_10, %c0_11], %12 {strides = array<i32>} : memref<16x128xf32, #tpu.memory_space<vmem>>, vector<16x128xf32>,
    return
  }
  func.func @transform_0(%arg0: i32) -> (i32, i32) {
    %c0_i32 = arith.constant 0 : i32
    %c0_i32_0 = arith.constant 0 : i32
    return %arg0, %c0_i32 : i32, i32
  }
  func.func @transform_1(%arg0: i32) -> (i32, i32) {
    %c0_i32 = arith.constant 0 : i32
    %c0_i32_0 = arith.constant 0 : i32
    %c0_i32_1 = arith.constant 0 : i32
    return %c0_i32, %c0_i32_0 : i32, i32
  }
  func.func @transform_2(%arg0: i32) -> (i32, i32) {
    %c0_i32 = arith.constant 0 : i32
    %c0_i32_0 = arith.constant 0 : i32
    %c0_i32_1 = arith.constant 0 : i32
    return %c0_i32, %c0_i32_0 : i32, i32
  }
  func.func @transform_3(%arg0: i32) -> (i32, i32) {
    %c0_i32 = arith.constant 0 : i32
    %c0_i32_0 = arith.constant 0 : i32
    %c0_i32_1 = arith.constant 0 : i32
    return %c0_i32, %c0_i32_0 : i32, i32
  }
  func.func @transform_4(%arg0: i32) -> (i32, i32) {
    %c0_i32 = arith.constant 0 : i32
    %c0_i32_0 = arith.constant 0 : i32
    %c0_i32_1 = arith.constant 0 : i32
    return %c0_i32, %c0_i32_0 : i32, i32
  }
  func.func @transform_5(%arg0: i32) -> (i32, i32) {
    %c0_i32 = arith.constant 0 : i32
    %c0_i32_0 = arith.constant 0 : i32
    return %arg0, %c0_i32 : i32, i32
  }
}

</mosaic_0001>

<llo_original>
// kernel: tpu_custom_call.1
$region0: #{tpu_custom_call.1}
  #allocation0 [shape = 'u32[]', space=smem, size = 0x4, offset = 0x4, fixed_abs, tag = 'smem constant byte address 0x4 - core index']
  #allocation1 [shape = 'u32[144,128]{1,0:T(1,128)}', space=vmem, size = 0x12000, scoped, tag = 'internal scratch']
  %s0 = inlined_call_operand.hbm [shape: bf16[2,32], index: 0, kind: input, shape index: {}]
  %s1 = inlined_call_operand.hbm [shape: bf16[32,32], index: 1, kind: input, shape index: {}]
  %s2 = inlined_call_operand.vmem [shape: f32[1,32], index: 2, kind: input, shape index: {}]
  %s3 = inlined_call_operand.hbm [shape: bf16[32,128], index: 3, kind: input, shape index: {}]
  %s4 = inlined_call_operand.vmem [shape: f32[1,128], index: 4, kind: input, shape index: {}]
  %s5 = inlined_call_operand.hbm [shape: f32[2,128], index: 5, kind: output, shape index: {}]
  %s6 = sld [smem:[#allocation0]]
  $region42: #{tpu_custom_call.1} parent=0
    _
  %s8 = ssub.s32 1, %s6
  %s9 = scalar_select 0, %s8, %s6
  $region1: #{tpu_custom_call.1} parent=0
    #allocation2 [shape = 'u8[4096]{0}', space=vmem, size = 0x1000, scoped, tag = 'input window, operand 0, single buffered']
    #allocation3 [shape = 's32[1]{0}', space=sflag, size = 0x4, scoped, tag = 'scoped memory for tpu_custom_call.1']
    #allocation4 [shape = 's32[1]{0}', space=sflag, size = 0x4, scoped, tag = 'scoped memory for tpu_custom_call.1']
    #allocation5 [shape = 'u8[8192]{0}', space=vmem, size = 0x2000, scoped, tag = 'input window, operand 1, single buffered']
    #allocation6 [shape = 's32[1]{0}', space=sflag, size = 0x4, scoped, tag = 'scoped memory for tpu_custom_call.1']
    #allocation7 [shape = 'u8[8192]{0}', space=vmem, size = 0x2000, scoped, tag = 'input window, operand 3, single buffered']
    #allocation8 [shape = 'u8[8192]{0}', space=vmem, size = 0x2000, scoped, tag = 'output window, operand 0, single buffered']
    %10 = vsyncpa [#allocation3], 0
    %11 = vsyncpa [#allocation6], 0
    %12 = vsyncpa [#allocation4], 0
    // Predicated region
    $region2: #{tpu_custom_call.1} parent=1 // pred_check
      _
    $region3: #{tpu_custom_call.1} parent=1 // pred_check_branch
      %14 = sbr.rel (0) target = $region5
    $region4: #{tpu_custom_call.1} parent=1 // pred_region
      %s16 = ssub.s32 128, 16
      %17 = vsyncadd [#allocation3], %s16
      %s18 = sshll.u32 [#allocation2], 4
      %s19 = int_to_ptr.vmem [resolvable:$true] %s18
      %24 = dma.hbm_to_vmem [thread:$0]  %s0, 16, %s19, [#allocation3], 16, 16, 1
    $region5: #{tpu_custom_call.1} parent=1 // pred_fallthru
      _
    // Predicated region
    $region6: #{tpu_custom_call.1} parent=1 // pred_check
      _
    $region7: #{tpu_custom_call.1} parent=1 // pred_check_branch
      %26 = sbr.rel (0) target = $region9
    $region8: #{tpu_custom_call.1} parent=1 // pred_region
      %s28 = ssub.s32 256, 256
      %29 = vsyncadd [#allocation6], %s28
      %s30 = sshll.u32 [#allocation5], 4
      %s31 = int_to_ptr.vmem [resolvable:$true] %s30
      %36 = dma.hbm_to_vmem [thread:$0]  %s1, 256, %s31, [#allocation6], 64, 64, 4
    $region9: #{tpu_custom_call.1} parent=1 // pred_fallthru
      _
    // Predicated region
    $region10: #{tpu_custom_call.1} parent=1 // pred_check
      _
    $region11: #{tpu_custom_call.1} parent=1 // pred_check_branch
      %38 = sbr.rel (0) target = $region13
    $region12: #{tpu_custom_call.1} parent=1 // pred_region
      _
    $region13: #{tpu_custom_call.1} parent=1 // pred_fallthru
      _
    // Predicated region
    $region14: #{tpu_custom_call.1} parent=1 // pred_check
      _
    $region15: #{tpu_custom_call.1} parent=1 // pred_check_branch
      %40 = sbr.rel (0) target = $region17
    $region16: #{tpu_custom_call.1} parent=1 // pred_region
      %s42 = ssub.s32 256, 256
      %43 = vsyncadd [#allocation6], %s42
      %s44 = sshll.u32 [#allocation7], 4
      %s45 = int_to_ptr.vmem [resolvable:$true] %s44
      %50 = dma.hbm_to_vmem [thread:$0]  %s3, 256, %s45, [#allocation6], 64, 64, 4
    $region17: #{tpu_custom_call.1} parent=1 // pred_fallthru
      _
    // Predicated region
    $region18: #{tpu_custom_call.1} parent=1 // pred_check
      _
    $region19: #{tpu_custom_call.1} parent=1 // pred_check_branch
      %52 = sbr.rel (0) target = $region21
    $region20: #{tpu_custom_call.1} parent=1 // pred_region
      _
    $region21: #{tpu_custom_call.1} parent=1 // pred_fallthru
      _
    // Predicated region
    $region22: #{tpu_custom_call.1} parent=1 // pred_check
      _
    $region23: #{tpu_custom_call.1} parent=1 // pred_check_branch
      %54 = sbr.rel (0) target = $region25
    $region24: #{tpu_custom_call.1} parent=1 // pred_region
      %55 = dma.done [#allocation3], 128
    $region25: #{tpu_custom_call.1} parent=1 // pred_fallthru
      _
    // Predicated region
    $region26: #{tpu_custom_call.1} parent=1 // pred_check
      _
    $region27: #{tpu_custom_call.1} parent=1 // pred_check_branch
      %57 = sbr.rel (0) target = $region29
    $region28: #{tpu_custom_call.1} parent=1 // pred_region
      %58 = dma.done [#allocation6], 256
    $region29: #{tpu_custom_call.1} parent=1 // pred_fallthru
      _
    // Predicated region
    $region30: #{tpu_custom_call.1} parent=1 // pred_check
      _
    $region31: #{tpu_custom_call.1} parent=1 // pred_check_branch
      %60 = sbr.rel (0) target = $region33
    $region32: #{tpu_custom_call.1} parent=1 // pred_region
      %61 = dma.done [#allocation6], 256
    $region33: #{tpu_custom_call.1} parent=1 // pred_fallthru
      _
    %v63 = vld [vmem:[#allocation2] sm:$0x1]
    %v64 = vld [vmem:[#allocation2 + $0x1] sm:$0x1]
    %v65 = vld [vmem:[#allocation2 + $0x2] sm:$0x1]
    %v66 = vld [vmem:[#allocation2 + $0x3] sm:$0x1]
    %v67 = vld [vmem:[#allocation2 + $0x4] sm:$0x1]
    %v68 = vld [vmem:[#allocation2 + $0x5] sm:$0x1]
    %v69 = vld [vmem:[#allocation2 + $0x6] sm:$0x1]
    %v70 = vld [vmem:[#allocation2 + $0x7] sm:$0x1]
    %v71 = vld [vmem:[#allocation5] sm:$0xf]
    %v72 = vld [vmem:[#allocation5 + $0x4] sm:$0xf]
    %v73 = vld [vmem:[#allocation5 + $0x8] sm:$0xf]
    %v74 = vld [vmem:[#allocation5 + $0xc] sm:$0xf]
    %v75 = vld [vmem:[%s2] sm:$0x1]
    %v77 = vlaneseq
    %v78 = vshrl.u32 %v77, 7
    %v79 = vsub.s32 0, %v78
    %v80 = vrot.slane %v75, %v79
    %v90 = vcombine.low %v63, %v64
    %v91 = vcombine.low %v65, %v66
    %v92 = vcombine.low %v67, %v68
    %v93 = vcombine.low %v69, %v70
    %v95 = vunpack.c.l.s4 1966171168
    %v96 = vunpack.c.0.s8 %v95
    %v97 = vlaneseq
    %v98 = vshrl.u32 %v97, 7
    %v99 = vsub.s32 %v96, %v98
    %v100 = vrot.slane %v90, %v99
    %v102 = vunpack.c.l.s4 1966171168
    %v103 = vunpack.c.0.s8 %v102
    %v104 = vlaneseq
    %v105 = vshrl.u32 %v104, 7
    %v106 = vsub.s32 %v103, %v105
    %v107 = vrot.slane %v91, %v106
    %v109 = vunpack.c.l.s4 1966171168
    %v110 = vunpack.c.0.s8 %v109
    %v111 = vlaneseq
    %v112 = vshrl.u32 %v111, 7
    %v113 = vsub.s32 %v110, %v112
    %v114 = vrot.slane %v92, %v113
    %v116 = vunpack.c.l.s4 1966171168
    %v117 = vunpack.c.0.s8 %v116
    %v118 = vlaneseq
    %v119 = vshrl.u32 %v118, 7
    %v120 = vsub.s32 %v117, %v119
    %v121 = vrot.slane %v93, %v120
    %v122 = vcombine.low %v100, %v107
    %v123 = vcombine.low %v114, %v121
    %v125 = vunpack.c.l.s4 1966171168
    %v126 = vunpack.c.0.s8 %v125
    %v127 = vlaneseq
    %v128 = vshrl.u32 %v127, 7
    %v129 = vsub.s32 %v126, %v128
    %v130 = vrot.slane %v122, %v129
    %v132 = vunpack.c.l.s4 1966171168
    %v133 = vunpack.c.0.s8 %v132
    %v134 = vlaneseq
    %v135 = vshrl.u32 %v134, 7
    %v136 = vsub.s32 %v133, %v135
    %v137 = vrot.slane %v123, %v136
    %v138 = vcombine.low %v130, %v137
    %v143 = vunpack.c.l.b16 %v71
    %v144 = vunpack.c.l.b16 %v72
    %v145 = vunpack.c.l.b16 %v73
    %v146 = vunpack.c.l.b16 %v74
    %v147 = vpack.c.b16 %v144, %v143
    %v148 = vpack.c.b16 %v146, %v145
    %vm151 = vcmask 261120
    %v153 = vsel %vm151, %v138, 0
    %155 = vmatprep.subr.bf16.mxu0 0
    %156 = vmatpush1.bf16.msra.mxu0 0
    %157 = vmatprep.subr.bf16.mxu0 0
    %158 = vmatpush1.bf16.msra.mxu0 0
    %159 = vmatprep.subr.bf16.mxu0 0
    %160 = vmatpush1.bf16.msra.mxu0 0
    %161 = vmatprep.subr.bf16.mxu0 0
    %162 = vmatpush1.bf16.msra.mxu0 0
    %163 = vmatprep.subr.bf16.mxu0 0
    %164 = vmatpush1.bf16.msra.mxu0 0
    %165 = vmatprep.subr.bf16.mxu0 0
    %166 = vmatpush1.bf16.msra.mxu0 0
    %167 = vmatprep.subr.bf16.mxu0 0
    %168 = vmatpush1.bf16.msra.mxu0 %v148
    %169 = vmatprep.subr.bf16.mxu0 0
    %170 = vmatpush1.bf16.msra.mxu0 %v147
    %171 = vmatprep.subr.bf16.mxu0 0
    %172 = vmatpush2.bf16.msra.mxu0 0
    %173 = vmatprep.subr.bf16.mxu0 0
    %174 = vmatpush2.bf16.msra.mxu0 0
    %175 = vmatprep.subr.bf16.mxu0 0
    %176 = vmatpush2.bf16.msra.mxu0 0
    %177 = vmatprep.subr.bf16.mxu0 0
    %178 = vmatpush2.bf16.msra.mxu0 0
    %179 = vmatprep.subr.bf16.mxu0 0
    %180 = vmatpush2.bf16.msra.mxu0 0
    %181 = vmatprep.subr.bf16.mxu0 0
    %182 = vmatpush2.bf16.msra.mxu0 0
    %183 = vmatprep.subr.bf16.mxu0 0
    %184 = vmatpush2.bf16.msra.mxu0 0
    %185 = vmatprep.subr.bf16.mxu0 0
    %186 = vmatpush2.bf16.msra.mxu0 0
    %187 = vmatprep.mubr.bf16.mxu0 0
    %188 = vmatmul.mubr.bf16.gmra.mxu0 %v153
    %v189 = vpop.f32.mrf.mxu0
    %v190 = vadd.f32 %v80, %v189
    %v191 = vpop.f32.mrf.mxu0
    %v192 = vpop.f32.mrf.mxu0
    %v193 = vadd.f32 %v80, %v192
    %v194 = vpop.f32.mrf.mxu0
    %195 = vdwg.mxu0
    %v196 = vtanh.pop %v190
    %v197 = vtanh.pop %v193
    %v198 = vpack.c.bf16 %v197, %v196
    %v199 = vld [vmem:[#allocation7] sm:$0xf]
    %v200 = vld [vmem:[#allocation7 + $0x4] sm:$0xf]
    %v201 = vld [vmem:[#allocation7 + $0x8] sm:$0xf]
    %v202 = vld [vmem:[#allocation7 + $0xc] sm:$0xf]
    %v203 = vld [vmem:[%s4] sm:$0x1]
    %v205 = vlaneseq
    %v206 = vshrl.u32 %v205, 7
    %v207 = vsub.s32 0, %v206
    %v208 = vrot.slane %v203, %v207
    %v214 = vunpack.c.l.b16 %v199
    %v215 = vunpack.c.l.b16 %v200
    %v216 = vunpack.c.l.b16 %v201
    %v217 = vunpack.c.l.b16 %v202
    %v218 = vpack.c.b16 %v215, %v214
    %v219 = vpack.c.b16 %v217, %v216
    %v223 = vsel %vm151, %v198, 0
    %225 = vmatprep.subr.bf16.mxu0 0
    %226 = vmatpush1.bf16.msra.mxu0 0
    %227 = vmatprep.subr.bf16.mxu0 0
    %228 = vmatpush1.bf16.msra.mxu0 0
    %229 = vmatprep.subr.bf16.mxu0 0
    %230 = vmatpush1.bf16.msra.mxu0 0
    %231 = vmatprep.subr.bf16.mxu0 0
    %232 = vmatpush1.bf16.msra.mxu0 0
    %233 = vmatprep.subr.bf16.mxu0 0
    %234 = vmatpush1.bf16.msra.mxu0 0
    %235 = vmatprep.subr.bf16.mxu0 0
    %236 = vmatpush1.bf16.msra.mxu0 0
    %237 = vmatprep.subr.bf16.mxu0 0
    %238 = vmatpush1.bf16.msra.mxu0 %v219
    %239 = vmatprep.subr.bf16.mxu0 0
    %240 = vmatpush1.bf16.msra.mxu0 %v218
    %241 = vmatprep.subr.bf16.mxu0 0
    %242 = vmatpush2.bf16.msra.mxu0 0
    %243 = vmatprep.subr.bf16.mxu0 0
    %244 = vmatpush2.bf16.msra.mxu0 0
    %245 = vmatprep.subr.bf16.mxu0 0
    %246 = vmatpush2.bf16.msra.mxu0 0
    %247 = vmatprep.subr.bf16.mxu0 0
    %248 = vmatpush2.bf16.msra.mxu0 0
    %249 = vmatprep.subr.bf16.mxu0 0
    %250 = vmatpush2.bf16.msra.mxu0 0
    %251 = vmatprep.subr.bf16.mxu0 0
    %252 = vmatpush2.bf16.msra.mxu0 0
    %253 = vmatprep.subr.bf16.mxu0 0
    %254 = vmatpush2.bf16.msra.mxu0 0
    %255 = vmatprep.subr.bf16.mxu0 0
    %256 = vmatpush2.bf16.msra.mxu0 0
    %257 = vmatprep.mubr.bf16.mxu0 0
    %258 = vmatmul.mubr.bf16.gmra.mxu0 %v223
    %v259 = vpop.f32.mrf.mxu0
    %v260 = vadd.f32 %v208, %v259
    %v261 = vpop.f32.mrf.mxu0
    %v262 = vpop.f32.mrf.mxu0
    %v263 = vadd.f32 %v208, %v262
    %v264 = vpop.f32.mrf.mxu0
    %265 = vdwg.mxu0
    %266 = vst [vmem:[#allocation8] sm:$0xff] %v260
    %267 = vst [vmem:[#allocation8 + $0x8] sm:$0xff] %v263
    // Predicated region
    $region34: #{tpu_custom_call.1} parent=1 // pred_check
      _
    $region35: #{tpu_custom_call.1} parent=1 // pred_check_branch
      %269 = sbr.rel (0) target = $region37
    $region36: #{tpu_custom_call.1} parent=1 // pred_region
      %s271 = ssub.s32 256, 32
      %272 = vsyncadd [#allocation4], %s271
      %s273 = sshll.u32 [#allocation8], 4
      %s274 = int_to_ptr.vmem [resolvable:$true] %s273
      %279 = dma.vmem_to_hbm [thread:$0]  %s274, 32, %s5, [#allocation4], 32, 32, 2
    $region37: #{tpu_custom_call.1} parent=1 // pred_fallthru
      _
    // Predicated region
    $region38: #{tpu_custom_call.1} parent=1 // pred_check
      _
    $region39: #{tpu_custom_call.1} parent=1 // pred_check_branch
      %281 = sbr.rel (0) target = $region41
    $region40: #{tpu_custom_call.1} parent=1 // pred_region
      %282 = dma.done [#allocation4], 256
    $region41: #{tpu_custom_call.1} parent=1 // pred_fallthru
      _
    %283 = vsyncpa [#allocation3], 1
    %284 = vsyncpa [#allocation6], 1
    %285 = vsyncpa [#allocation4], 1

</llo_original>
